<compile_context>
chip_gen: v6e
topology: v6e:2x2x1
jax: 0.10.0
libtpu: 0.0.40
codegen_flags: <defaults>
</compile_context>

<pallas_src>
import functools
import math

import jax
import jax.numpy as jnp
import numpy as np
from jax import lax
from jax.experimental import pallas as pl
from jax.experimental.pallas import tpu as pltpu


def _round_up(x, m):
    return ((x + m - 1) // m) * m


# ---------------------------------------------------------------------------
# Fused kernel.  Per chain step (= k_chain original time steps):
#   rec  = h @ AdecCols + x_blk @ WrecCols   (decoded records, off the chain)
#   h    = h @ A^k      + x_blk @ Wmix       (the only dependent matmul)
# ---------------------------------------------------------------------------
def _rnn_fused_kernel(x_ref, apow_ref, wmix_ref, adec_ref, wrec_ref,
                      out_ref, h_ref, *, n_r, d_out_pad, compute_dtype,
                      use_wrec, unroll):
    @pl.when(pl.program_id(1) == 0)
    def _():
        h_ref[...] = jnp.zeros_like(h_ref)          # h_0 = 0 (per batch block)

    apow = apow_ref[...]                            # (H_pad, H_pad)
    wmix = wmix_ref[...]                            # (k_chain*D_in, H_pad)
    adec = adec_ref[...]                            # (H_pad, n_r*D_out_pad)
    wrec = wrec_ref[...] if use_wrec else None      # (k_chain*D_in, n_r*D_out_pad)
    m_blk = x_ref.shape[0]

    def step(m, h):
        h_c = h.astype(compute_dtype)
        xm = x_ref[m].astype(compute_dtype)         # (B_blk, k_chain*D_in)
        # Decoded records of this chain block (independent of the next h).
        rec = jnp.dot(h_c, adec, preferred_element_type=jnp.float32)
        if use_wrec:
            rec = rec + jnp.dot(xm, wrec, preferred_element_type=jnp.float32)
        base = m * n_r
        for i in range(n_r):                        # lane-dense (B_blk,128) stores
            out_ref[base + i] = rec[:, i * d_out_pad:(i + 1) * d_out_pad].astype(
                out_ref.dtype)
        # Dependent chain: one matmul per k_chain steps; carry stays f32.
        return (jnp.dot(h_c, apow, preferred_element_type=jnp.float32)
                + jnp.dot(xm, wmix, preferred_element_type=jnp.float32))

    h_ref[...] = lax.fori_loop(0, m_blk, step, h_ref[...],
                               unroll=max(1, min(unroll, m_blk)))


# ---------------------------------------------------------------------------
# Wrapper: PyTorch batch_first conventions in/out.
# ---------------------------------------------------------------------------
def rnn_net_forward(x_btd, w_ih, w_hh, w_dec, *, dt=0.2, rec_step_dt=1,
                    compute_dtype=jnp.bfloat16, batch_shards=1,
                    chain_target=8, unroll=4, max_block_steps=None):
    """x_btd: (B, T, D_in); w_ih: (H, D_in); w_hh: (H, H); w_dec: (D_out, H).
    Returns (B, n_rec, D_out), n_rec = ceil(T / rec_step_dt).
    compute_dtype: matmul operand dtype (carry/accumulation stay f32).
    batch_shards: set 2 on v7x to shard the parallel batch axis across both TCs."""
    x_btd = x_btd.astype(jnp.float32)
    B, T, D_in = x_btd.shape
    H = w_hh.shape[0]
    D_out = w_dec.shape[0]
    r = int(rec_step_dt)
    n_rec = max(int(np.ceil(T / r)), 1)

    # Chain blocking: n_r records per chain step, k_chain original steps each.
    n_r = max(1, chain_target // r)
    k_chain = n_r * r

    # Padded sizes (lane-dense H / D_out, sublane-dense B).
    H_pad = max(_round_up(H, 128), 128)
    D_out_pad = max(_round_up(D_out, 128), 128)
    batch_shards = max(1, int(batch_shards))
    B_pad = _round_up(B, 8 * batch_shards)
    B_blk = B_pad // batch_shards
    kD = k_chain * D_in

    f32 = jnp.float32
    w_ih = w_ih.astype(f32)
    w_hh = w_hh.astype(f32)
    w_dec = w_dec.astype(f32)

    # --- fold dt into the weights and precompose powers of A (f32, tiny) ----
    A = (1.0 - dt) * jnp.eye(H, dtype=f32) + dt * w_hh.T          # (H, H)
    powers = [jnp.eye(H, dtype=f32)]
    for _ in range(k_chain):
        powers.append(powers[-1] @ A)
    wih_dt = dt * w_ih.T                                          # (D_in, H)
    wdec_t = w_dec.T                                              # (H, D_out)
    # chain update weights: h' = h @ A^k + x_blk @ Wmix
    wmix = jnp.concatenate(
        [wih_dt @ powers[k_chain - 1 - j] for j in range(k_chain)], axis=0)
    # decoded-record weights: rec_i = h @ (A^{i*r} Wdec) + x_blk @ Wrec_i
    proj = [wih_dt @ powers[p] @ wdec_t for p in range(k_chain)]  # dt Wih^T A^p Wdec^T

    apow_p = jnp.zeros((H_pad, H_pad), f32).at[:H, :H].set(powers[k_chain])
    wmix_p = jnp.zeros((kD, H_pad), f32).at[:, :H].set(wmix)
    adec_p = jnp.zeros((H_pad, n_r * D_out_pad), f32)
    wrec_p = jnp.zeros((kD, n_r * D_out_pad), f32)
    for i in range(n_r):
        c0 = i * D_out_pad
        adec_p = adec_p.at[:H, c0:c0 + D_out].set(powers[i * r] @ wdec_t)
        for j in range(i * r):
            wrec_p = wrec_p.at[j * D_in:(j + 1) * D_in, c0:c0 + D_out].set(
                proj[i * r - 1 - j])
    apow_p = apow_p.astype(compute_dtype)
    wmix_p = wmix_p.astype(compute_dtype)
    adec_p = adec_p.astype(compute_dtype)
    wrec_p = wrec_p.astype(compute_dtype)

    # --- generation-aware VMEM budget → chain steps per time tile ------------
    try:
        vmem_cap = int(pltpu.get_tpu_info().vmem_capacity_bytes)
    except Exception:
        vmem_cap = 64 << 20                               # safe on v5e/v6e/v7x
    vmem_budget = min(vmem_cap // 2, 96 << 20)
    vmem_limit = max(32 << 20, min(vmem_cap - (8 << 20), 120 << 20))
    cd_bytes = jnp.dtype(compute_dtype).itemsize
    fixed = 3 * cd_bytes * (H_pad * H_pad + kD * H_pad
                            + (H_pad + kD) * n_r * D_out_pad)   # weight buffers
    fixed += 4 * B_blk * H_pad + (2 << 20)                      # h scratch + headroom
    per_step = B_blk * (2 * cd_bytes * kD + 2 * 4 * n_r * D_out_pad)
    n_chain_needed = pl.cdiv(T, k_chain)
    m_blk = int(max(1, min((vmem_budget - fixed) // per_step, n_chain_needed, 1024)))
    if max_block_steps is not None:
        m_blk = max(1, min(m_blk, int(max_block_steps)))
    T_pad = _round_up(T, k_chain * m_blk)
    n_chain = T_pad // k_chain
    grid_t = n_chain // m_blk
    n_rec_pad = n_chain * n_r

    # --- arrange x as (n_chain, B_pad, k_chain*D_in) for lane-dense streaming -
    x = x_btd
    if B_pad != B or T_pad != T:
        x = jnp.pad(x, ((0, B_pad - B), (0, T_pad - T), (0, 0)))
    x = x.reshape(B_pad, n_chain, k_chain, D_in)
    x = jnp.transpose(x, (1, 0, 2, 3)).reshape(n_chain, B_pad, kD)
    x = x.astype(compute_dtype)
    # TODO(synk): this transpose of x (smallest streamed array) still costs one
    # HBM round trip; it could be folded into a custom x index_map.

    kernel = functools.partial(
        _rnn_fused_kernel, n_r=n_r, d_out_pad=D_out_pad,
        compute_dtype=compute_dtype, use_wrec=(n_r > 1), unroll=unroll)

    out_pad = pl.pallas_call(
        kernel,
        out_shape=jax.ShapeDtypeStruct((n_rec_pad, B_pad, D_out_pad), jnp.float32),
        grid=(batch_shards, grid_t),
        in_specs=[
            pl.BlockSpec((m_blk, B_blk, kD), lambda bi, ti: (ti, bi, 0)),
            pl.BlockSpec((H_pad, H_pad), lambda bi, ti: (0, 0)),
            pl.BlockSpec((kD, H_pad), lambda bi, ti: (0, 0)),
            pl.BlockSpec((H_pad, n_r * D_out_pad), lambda bi, ti: (0, 0)),
            pl.BlockSpec((kD, n_r * D_out_pad), lambda bi, ti: (0, 0)),
        ],
        out_specs=pl.BlockSpec((m_blk * n_r, B_blk, D_out_pad),
                               lambda bi, ti: (ti, bi, 0)),
        scratch_shapes=[pltpu.VMEM((B_blk, H_pad), jnp.float32)],
        compiler_params=pltpu.CompilerParams(
            dimension_semantics=("parallel", "arbitrary"),
            vmem_limit_bytes=int(vmem_limit)),
    )(x, apow_p, wmix_p, adec_p, wrec_p)

    out = out_pad[:n_rec, :B, :D_out]                 # drop time/batch/D_out padding
    return jnp.transpose(out, (1, 0, 2))              # batch_first (B, n_rec, D_out)


# ---------------------------------------------------------------------------
# Pure-JAX reference mirroring the PyTorch rnn_forward + decoder.
# ---------------------------------------------------------------------------
def rnn_net_forward_ref(x_btd, w_ih, w_hh, w_dec, *, dt=0.2, rec_step_dt=1):
    x_tbd = jnp.transpose(x_btd.astype(jnp.float32), (1, 0, 2))
    T, B, _ = x_tbd.shape
    H = w_hh.shape[0]
    h = jnp.zeros((B, H), jnp.float32)
    rec = []
    for t in range(T):
        if t % rec_step_dt == 0:
            rec.append(h)
        f = h @ w_hh.T + x_tbd[t] @ w_ih.T
        h = (1.0 - dt) * h + dt * f
    rec = jnp.stack(rec, 0)                           # (n_rec, B, H)
    out = rec @ w_dec.T
    return jnp.transpose(out, (1, 0, 2))


def init_params(key, dim_in, dim_hid, dim_out, *, g=None,
                scale_input_weights=False, out_scale='small'):
    """Deterministic init matching RNN_Net.__init__ (gaussian_init=True, bias=False)."""
    k1, k2, k3 = jax.random.split(key, 3)
    std_ih = (1.0 / math.sqrt(dim_in)) if scale_input_weights else 1.0
    std_hh = 1.0 / math.sqrt(dim_hid)
    if g is not None:
        std_hh *= g
    std_dec = 1.0 / math.sqrt(dim_hid)
    w_ih = std_ih * jax.random.normal(k1, (dim_hid, dim_in), jnp.float32)
    w_hh = std_hh * jax.random.normal(k2, (dim_hid, dim_hid), jnp.float32)
    w_dec = std_dec * jax.random.normal(k3, (dim_out, dim_hid), jnp.float32)
    if out_scale == 'small':
        w_dec = w_dec * (1.0 / math.sqrt(dim_hid))
    return w_ih, w_hh, w_dec


if __name__ == "__main__":
    # TODO(synk): noise-injection path (noise_std > 0, torch.randn) not ported;
    # this implements the default noise_std=0.0 forward (no tanh, matching the
    # module's custom rnn_forward).
    B, T, D_IN, D_HID, D_OUT = 2, 8, 4, 32, 4
    DT = 0.2

    key = jax.random.PRNGKey(0)
    kx, kp, kx2 = jax.random.split(key, 3)
    w_ih, w_hh, w_dec = init_params(kp, D_IN, D_HID, D_OUT)

    def check(x, r, compute_dtype, rtol, atol, **kw):
        out = rnn_net_forward(x, w_ih, w_hh, w_dec, dt=DT, rec_step_dt=r,
                              compute_dtype=compute_dtype, **kw)
        out = jax.block_until_ready(out)
        ref = rnn_net_forward_ref(x, w_ih, w_hh, w_dec, dt=DT, rec_step_dt=r)
        n_rec = max(int(np.ceil(x.shape[1] / r)), 1)
        assert out.shape == (x.shape[0], n_rec, D_OUT), out.shape
        np.testing.assert_allclose(np.asarray(out), np.asarray(ref),
                                   rtol=rtol, atol=atol)

    x_small = jax.random.normal(kx, (B, T, D_IN), jnp.float32)
    # f32 operand path (exact up to matmul reordering) over several rec strides.
    for r in (1, 2, 3):
        check(x_small, r, jnp.float32, 5e-4, 5e-4)
    # bf16 operands / f32 carry+accumulation (the fast path).
    check(x_small, 1, jnp.bfloat16, 3e-2, 3e-3)
    # multi-tile grid (h carried across time tiles) + ragged batch padding.
    x_long = jax.random.normal(kx2, (3, 40, D_IN), jnp.float32)
    check(x_long, 1, jnp.float32, 5e-4, 5e-4, max_block_steps=2)
    # parallel batch-shard axis (megacore path on v7x; sequential elsewhere).
    x_b4 = jax.random.normal(kx, (4, 16, D_IN), jnp.float32)
    check(x_b4, 1, jnp.float32, 5e-4, 5e-4, batch_shards=2)

    print("KERNEL_OK")
</pallas_src>

<mosaic_0001>
module attributes {stable_mosaic.version = 11 : i64} {
  func.func @_rnn_fused_kernel(%arg0: i32, %arg1: i32, %arg2: memref<1x8x32xf32, #tpu.memory_space<vmem>>, %arg3: memref<128x128xf32, #tpu.memory_space<vmem>>, %arg4: memref<32x128xf32, #tpu.memory_space<vmem>>, %arg5: memref<128x1024xf32, #tpu.memory_space<vmem>>, %arg6: memref<32x1024xf32, #tpu.memory_space<vmem>>, %arg7: memref<8x8x128xf32, #tpu.memory_space<vmem>>, %arg8: memref<8x128xf32, #tpu.memory_space<vmem>>) attributes {dimension_semantics = [#tpu.dimension_semantics<parallel>, #tpu.dimension_semantics<arbitrary>], iteration_bounds = array<i64: 1, 1>, scalar_prefetch = 0 : i64, scratch_operands = 1 : i64, tpu.core_type = #tpu.core_type<tc>, window_params = [{transform_indices = @transform_0, window_bounds = array<i64: 1, 8, 32>}, {pipeline_mode = #tpu.pipeline_mode<synchronous>, transform_indices = @transform_1, window_bounds = array<i64: 128, 128>}, {pipeline_mode = #tpu.pipeline_mode<synchronous>, transform_indices = @transform_2, window_bounds = array<i64: 32, 128>}, {pipeline_mode = #tpu.pipeline_mode<synchronous>, transform_indices = @transform_3, window_bounds = array<i64: 128, 1024>}, {pipeline_mode = #tpu.pipeline_mode<synchronous>, transform_indices = @transform_4, window_bounds = array<i64: 32, 1024>}, {transform_indices = @transform_5, window_bounds = array<i64: 8, 8, 128>}]} {
    %c0_i32 = arith.constant 0 : i32
    %0 = arith.cmpi eq, %arg1, %c0_i32 : i32
    %1 = arith.extui %0 : i1 to i32
    %c0_i32_0 = arith.constant 0 : i32
    %2 = arith.cmpi ne, %1, %c0_i32_0 : i32
    scf.if %2 {
      %cst_36 = arith.constant 0.000000e+00 : f32
      %67 = vector.broadcast %cst_36 : f32 to vector<8x128xf32>
      %c0_37 = arith.constant 0 : index
      %c0_38 = arith.constant 0 : index
      %68 = vector.load %arg8[%c0_37, %c0_38] : memref<8x128xf32, #tpu.memory_space<vmem>>, vector<8x128xf32>
      tpu.vector_store %arg8[%c0_37, %c0_38], %67 {strides = array<i32>} : memref<8x128xf32, #tpu.memory_space<vmem>>, vector<8x128xf32>,
    } else {
    }
    %c0 = arith.constant 0 : index
    %c0_1 = arith.constant 0 : index
    %3 = vector.load %arg3[%c0, %c0_1] : memref<128x128xf32, #tpu.memory_space<vmem>>, vector<128x128xf32>
    %c0_2 = arith.constant 0 : index
    %c0_3 = arith.constant 0 : index
    %4 = vector.load %arg4[%c0_2, %c0_3] : memref<32x128xf32, #tpu.memory_space<vmem>>, vector<32x128xf32>
    %c0_4 = arith.constant 0 : index
    %c0_5 = arith.constant 0 : index
    %5 = vector.load %arg5[%c0_4, %c0_5] : memref<128x1024xf32, #tpu.memory_space<vmem>>, vector<128x1024xf32>
    %c0_6 = arith.constant 0 : index
    %c0_7 = arith.constant 0 : index
    %6 = vector.load %arg6[%c0_6, %c0_7] : memref<32x1024xf32, #tpu.memory_space<vmem>>, vector<32x1024xf32>
    %c0_8 = arith.constant 0 : index
    %c0_9 = arith.constant 0 : index
    %7 = vector.load %arg8[%c0_8, %c0_9] : memref<8x128xf32, #tpu.memory_space<vmem>>, vector<8x128xf32>
    %c0_i32_10 = arith.constant 0 : i32
    %8 = arith.index_cast %c0_i32_10 : i32 to index
    %c0_11 = arith.constant 0 : index
    %c0_12 = arith.constant 0 : index
    %9 = vector.load %arg2[%8, %c0_11, %c0_12] : memref<1x8x32xf32, #tpu.memory_space<vmem>>, vector<1x8x32xf32>
    %10 = vector.shape_cast %9 : vector<1x8x32xf32> to vector<8x32xf32>
    %cst = arith.constant dense<0.000000e+00> : vector<8x1024xf32>
    %11 = tpu.matmul %7, %5, %cst {dimension_numbers = #tpu.dot_dimension_numbers<[1], [0], [0], [1], [0, 0, 1, 1], [], []>} : vector<8x128xf32>, vector<128x1024xf32>, vector<8x1024xf32> -> vector<8x1024xf32>
    %cst_13 = arith.constant dense<0.000000e+00> : vector<8x1024xf32>
    %12 = tpu.matmul %10, %6, %cst_13 {dimension_numbers = #tpu.dot_dimension_numbers<[1], [0], [0], [1], [0, 0, 1, 1], [], []>} : vector<8x32xf32>, vector<32x1024xf32>, vector<8x1024xf32> -> vector<8x1024xf32>
    %13 = arith.addf %11, %12 : vector<8x1024xf32>
    %c8_i32 = arith.constant 8 : i32
    %14 = arith.muli %c0_i32_10, %c8_i32 : i32
    %15 = vector.extract_strided_slice %13 {offsets = [0, 0], sizes = [8, 128], strides = [1, 1]} : vector<8x1024xf32> to vector<8x128xf32>
    %c0_i32_14 = arith.constant 0 : i32
    %16 = arith.addi %14, %c0_i32_14 : i32
    %17 = arith.index_cast %16 : i32 to index
    %c0_15 = arith.constant 0 : index
    %c0_16 = arith.constant 0 : index
    %18 = vector.load %arg7[%17, %c0_15, %c0_16] : memref<8x8x128xf32, #tpu.memory_space<vmem>>, vector<1x8x128xf32>
    %19 = vector.shape_cast %18 : vector<1x8x128xf32> to vector<8x128xf32>
    %20 = vector.shape_cast %15 : vector<8x128xf32> to vector<1x8x128xf32>
    tpu.vector_store %arg7[%17, %c0_15, %c0_16], %20 {strides = array<i32>} : memref<8x8x128xf32, #tpu.memory_space<vmem>>, vector<1x8x128xf32>,
    %21 = vector.extract_strided_slice %13 {offsets = [0, 128], sizes = [8, 128], strides = [1, 1]} : vector<8x1024xf32> to vector<8x128xf32>
    %c1_i32 = arith.constant 1 : i32
    %22 = arith.addi %14, %c1_i32 : i32
    %23 = arith.index_cast %22 : i32 to index
    %c0_17 = arith.constant 0 : index
    %c0_18 = arith.constant 0 : index
    %24 = vector.load %arg7[%23, %c0_17, %c0_18] : memref<8x8x128xf32, #tpu.memory_space<vmem>>, vector<1x8x128xf32>
    %25 = vector.shape_cast %24 : vector<1x8x128xf32> to vector<8x128xf32>
    %26 = vector.shape_cast %21 : vector<8x128xf32> to vector<1x8x128xf32>
    tpu.vector_store %arg7[%23, %c0_17, %c0_18], %26 {strides = array<i32>} : memref<8x8x128xf32, #tpu.memory_space<vmem>>, vector<1x8x128xf32>,
    %27 = vector.extract_strided_slice %13 {offsets = [0, 256], sizes = [8, 128], strides = [1, 1]} : vector<8x1024xf32> to vector<8x128xf32>
    %c2_i32 = arith.constant 2 : i32
    %28 = arith.addi %14, %c2_i32 : i32
    %29 = arith.index_cast %28 : i32 to index
    %c0_19 = arith.constant 0 : index
    %c0_20 = arith.constant 0 : index
    %30 = vector.load %arg7[%29, %c0_19, %c0_20] : memref<8x8x128xf32, #tpu.memory_space<vmem>>, vector<1x8x128xf32>
    %31 = vector.shape_cast %30 : vector<1x8x128xf32> to vector<8x128xf32>
    %32 = vector.shape_cast %27 : vector<8x128xf32> to vector<1x8x128xf32>
    tpu.vector_store %arg7[%29, %c0_19, %c0_20], %32 {strides = array<i32>} : memref<8x8x128xf32, #tpu.memory_space<vmem>>, vector<1x8x128xf32>,
    %33 = vector.extract_strided_slice %13 {offsets = [0, 384], sizes = [8, 128], strides = [1, 1]} : vector<8x1024xf32> to vector<8x128xf32>
    %c3_i32 = arith.constant 3 : i32
    %34 = arith.addi %14, %c3_i32 : i32
    %35 = arith.index_cast %34 : i32 to index
    %c0_21 = arith.constant 0 : index
    %c0_22 = arith.constant 0 : index
    %36 = vector.load %arg7[%35, %c0_21, %c0_22] : memref<8x8x128xf32, #tpu.memory_space<vmem>>, vector<1x8x128xf32>
    %37 = vector.shape_cast %36 : vector<1x8x128xf32> to vector<8x128xf32>
    %38 = vector.shape_cast %33 : vector<8x128xf32> to vector<1x8x128xf32>
    tpu.vector_store %arg7[%35, %c0_21, %c0_22], %38 {strides = array<i32>} : memref<8x8x128xf32, #tpu.memory_space<vmem>>, vector<1x8x128xf32>,
    %39 = vector.extract_strided_slice %13 {offsets = [0, 512], sizes = [8, 128], strides = [1, 1]} : vector<8x1024xf32> to vector<8x128xf32>
    %c4_i32 = arith.constant 4 : i32
    %40 = arith.addi %14, %c4_i32 : i32
    %41 = arith.index_cast %40 : i32 to index
    %c0_23 = arith.constant 0 : index
    %c0_24 = arith.constant 0 : index
    %42 = vector.load %arg7[%41, %c0_23, %c0_24] : memref<8x8x128xf32, #tpu.memory_space<vmem>>, vector<1x8x128xf32>
    %43 = vector.shape_cast %42 : vector<1x8x128xf32> to vector<8x128xf32>
    %44 = vector.shape_cast %39 : vector<8x128xf32> to vector<1x8x128xf32>
    tpu.vector_store %arg7[%41, %c0_23, %c0_24], %44 {strides = array<i32>} : memref<8x8x128xf32, #tpu.memory_space<vmem>>, vector<1x8x128xf32>,
    %45 = vector.extract_strided_slice %13 {offsets = [0, 640], sizes = [8, 128], strides = [1, 1]} : vector<8x1024xf32> to vector<8x128xf32>
    %c5_i32 = arith.constant 5 : i32
    %46 = arith.addi %14, %c5_i32 : i32
    %47 = arith.index_cast %46 : i32 to index
    %c0_25 = arith.constant 0 : index
    %c0_26 = arith.constant 0 : index
    %48 = vector.load %arg7[%47, %c0_25, %c0_26] : memref<8x8x128xf32, #tpu.memory_space<vmem>>, vector<1x8x128xf32>
    %49 = vector.shape_cast %48 : vector<1x8x128xf32> to vector<8x128xf32>
    %50 = vector.shape_cast %45 : vector<8x128xf32> to vector<1x8x128xf32>
    tpu.vector_store %arg7[%47, %c0_25, %c0_26], %50 {strides = array<i32>} : memref<8x8x128xf32, #tpu.memory_space<vmem>>, vector<1x8x128xf32>,
    %51 = vector.extract_strided_slice %13 {offsets = [0, 768], sizes = [8, 128], strides = [1, 1]} : vector<8x1024xf32> to vector<8x128xf32>
    %c6_i32 = arith.constant 6 : i32
    %52 = arith.addi %14, %c6_i32 : i32
    %53 = arith.index_cast %52 : i32 to index
    %c0_27 = arith.constant 0 : index
    %c0_28 = arith.constant 0 : index
    %54 = vector.load %arg7[%53, %c0_27, %c0_28] : memref<8x8x128xf32, #tpu.memory_space<vmem>>, vector<1x8x128xf32>
    %55 = vector.shape_cast %54 : vector<1x8x128xf32> to vector<8x128xf32>
    %56 = vector.shape_cast %51 : vector<8x128xf32> to vector<1x8x128xf32>
    tpu.vector_store %arg7[%53, %c0_27, %c0_28], %56 {strides = array<i32>} : memref<8x8x128xf32, #tpu.memory_space<vmem>>, vector<1x8x128xf32>,
    %57 = vector.extract_strided_slice %13 {offsets = [0, 896], sizes = [8, 128], strides = [1, 1]} : vector<8x1024xf32> to vector<8x128xf32>
    %c7_i32 = arith.constant 7 : i32
    %58 = arith.addi %14, %c7_i32 : i32
    %59 = arith.index_cast %58 : i32 to index
    %c0_29 = arith.constant 0 : index
    %c0_30 = arith.constant 0 : index
    %60 = vector.load %arg7[%59, %c0_29, %c0_30] : memref<8x8x128xf32, #tpu.memory_space<vmem>>, vector<1x8x128xf32>
    %61 = vector.shape_cast %60 : vector<1x8x128xf32> to vector<8x128xf32>
    %62 = vector.shape_cast %57 : vector<8x128xf32> to vector<1x8x128xf32>
    tpu.vector_store %arg7[%59, %c0_29, %c0_30], %62 {strides = array<i32>} : memref<8x8x128xf32, #tpu.memory_space<vmem>>, vector<1x8x128xf32>,
    %cst_31 = arith.constant dense<0.000000e+00> : vector<8x128xf32>
    %63 = tpu.matmul %7, %3, %cst_31 {dimension_numbers = #tpu.dot_dimension_numbers<[1], [0], [0], [1], [0, 0, 1, 1], [], []>} : vector<8x128xf32>, vector<128x128xf32>, vector<8x128xf32> -> vector<8x128xf32>
    %cst_32 = arith.constant dense<0.000000e+00> : vector<8x128xf32>
    %64 = tpu.matmul %10, %4, %cst_32 {dimension_numbers = #tpu.dot_dimension_numbers<[1], [0], [0], [1], [0, 0, 1, 1], [], []>} : vector<8x32xf32>, vector<32x128xf32>, vector<8x128xf32> -> vector<8x128xf32>
    %65 = arith.addf %63, %64 : vector<8x128xf32>
    %c1_i32_33 = arith.constant 1 : i32
    %c0_34 = arith.constant 0 : index
    %c0_35 = arith.constant 0 : index
    %66 = vector.load %arg8[%c0_34, %c0_35] : memref<8x128xf32, #tpu.memory_space<vmem>>, vector<8x128xf32>
    tpu.vector_store %arg8[%c0_34, %c0_35], %65 {strides = array<i32>} : memref<8x128xf32, #tpu.memory_space<vmem>>, vector<8x128xf32>,
    return
  }
  func.func @transform_0(%arg0: i32, %arg1: i32) -> (i32, i32, i32) {
    %c0_i32 = arith.constant 0 : i32
    %c0_i32_0 = arith.constant 0 : i32
    return %arg1, %arg0, %c0_i32 : i32, i32, i32
  }
  func.func @transform_1(%arg0: i32, %arg1: i32) -> (i32, i32) {
    %c0_i32 = arith.constant 0 : i32
    %c0_i32_0 = arith.constant 0 : i32
    %c0_i32_1 = arith.constant 0 : i32
    return %c0_i32, %c0_i32_0 : i32, i32
  }
  func.func @transform_2(%arg0: i32, %arg1: i32) -> (i32, i32) {
    %c0_i32 = arith.constant 0 : i32
    %c0_i32_0 = arith.constant 0 : i32
    %c0_i32_1 = arith.constant 0 : i32
    return %c0_i32, %c0_i32_0 : i32, i32
  }
  func.func @transform_3(%arg0: i32, %arg1: i32) -> (i32, i32) {
    %c0_i32 = arith.constant 0 : i32
    %c0_i32_0 = arith.constant 0 : i32
    %c0_i32_1 = arith.constant 0 : i32
    return %c0_i32, %c0_i32_0 : i32, i32
  }
  func.func @transform_4(%arg0: i32, %arg1: i32) -> (i32, i32) {
    %c0_i32 = arith.constant 0 : i32
    %c0_i32_0 = arith.constant 0 : i32
    %c0_i32_1 = arith.constant 0 : i32
    return %c0_i32, %c0_i32_0 : i32, i32
  }
  func.func @transform_5(%arg0: i32, %arg1: i32) -> (i32, i32, i32) {
    %c0_i32 = arith.constant 0 : i32
    %c0_i32_0 = arith.constant 0 : i32
    return %arg1, %arg0, %c0_i32 : i32, i32, i32
  }
}

</mosaic_0001>

<llo_original>
// kernel: tpu_custom_call.1
$region0: #{tpu_custom_call.1}
  #allocation0 [shape = 'u32[]', space=smem, size = 0x4, offset = 0x4, fixed_abs, tag = 'smem constant byte address 0x4 - core index']
  #allocation1 [shape = 'u32[144,128]{1,0:T(1,128)}', space=vmem, size = 0x12000, scoped, tag = 'internal scratch']
  #allocation2 [shape = 'f32[8,128]{1,0:T(8,128)}', space=vmem, size = 0x1000, scoped, tag = 'scratch operand']
  %s0 = inlined_call_operand.hbm [shape: f32[1,8,32], index: 0, kind: input, shape index: {}]
  %s1 = inlined_call_operand.hbm [shape: f32[128,128], index: 1, kind: input, shape index: {}]
  %s2 = inlined_call_operand.hbm [shape: f32[32,128], index: 2, kind: input, shape index: {}]
  %s3 = inlined_call_operand.hbm [shape: f32[128,1024], index: 3, kind: input, shape index: {}]
  %s4 = inlined_call_operand.hbm [shape: f32[32,1024], index: 4, kind: input, shape index: {}]
  %s5 = inlined_call_operand.hbm [shape: f32[8,8,128], index: 5, kind: output, shape index: {}]
  %s6 = sld [smem:[#allocation0]]
  $region54: #{tpu_custom_call.1} parent=0
    _
  %s8 = ssub.s32 1, %s6
  %s9 = scalar_select 0, %s8, %s6
  $region1: #{tpu_custom_call.1} parent=0
    #allocation3 [shape = 'u8[4096]{0}', space=vmem, size = 0x1000, scoped, tag = 'input window, operand 0, single buffered']
    #allocation4 [shape = 's32[1]{0}', space=sflag, size = 0x4, scoped, tag = 'scoped memory for tpu_custom_call.1']
    #allocation5 [shape = 's32[1]{0}', space=sflag, size = 0x4, scoped, tag = 'scoped memory for tpu_custom_call.1']
    #allocation6 [shape = 'u8[65536]{0}', space=vmem, size = 0x10000, scoped, tag = 'input window, operand 1, single buffered']
    #allocation7 [shape = 's32[1]{0}', space=sflag, size = 0x4, scoped, tag = 'scoped memory for tpu_custom_call.1']
    #allocation8 [shape = 'u8[16384]{0}', space=vmem, size = 0x4000, scoped, tag = 'input window, operand 2, single buffered']
    #allocation9 [shape = 'u8[524288]{0}', space=vmem, size = 0x80000, scoped, tag = 'input window, operand 3, single buffered']
    #allocation10 [shape = 's32[1]{0}', space=sflag, size = 0x4, scoped, tag = 'scoped memory for tpu_custom_call.1']
    #allocation11 [shape = 'u8[131072]{0}', space=vmem, size = 0x20000, scoped, tag = 'input window, operand 4, single buffered']
    #allocation12 [shape = 'u8[32768]{0}', space=vmem, size = 0x8000, scoped, tag = 'output window, operand 0, single buffered']
    %10 = vsyncpa [#allocation4], 0
    %11 = vsyncpa [#allocation7], 0
    %12 = vsyncpa [#allocation10], 0
    %13 = vsyncpa [#allocation5], 0
    // Predicated region
    $region2: #{tpu_custom_call.1} parent=1 // pred_check
      _
    $region3: #{tpu_custom_call.1} parent=1 // pred_check_branch
      %15 = sbr.rel (0) target = $region5
    $region4: #{tpu_custom_call.1} parent=1 // pred_region
      %s17 = ssub.s32 128, 128
      %18 = vsyncadd [#allocation4], %s17
      %s20 = sshll.u32 [#allocation3], 4
      %s21 = int_to_ptr.vmem [resolvable:$true] %s20
      %23 = dma.hbm_to_vmem [thread:$0]  %s0, 128, %s21, [#allocation4]
    $region5: #{tpu_custom_call.1} parent=1 // pred_fallthru
      _
    // Predicated region
    $region6: #{tpu_custom_call.1} parent=1 // pred_check
      _
    $region7: #{tpu_custom_call.1} parent=1 // pred_check_branch
      %25 = sbr.rel (0) target = $region9
    $region8: #{tpu_custom_call.1} parent=1 // pred_region
      %s27 = ssub.s32 2048, 2048
      %28 = vsyncadd [#allocation7], %s27
      %s29 = sshll.u32 [#allocation6], 4
      %s30 = int_to_ptr.vmem [resolvable:$true] %s29
      %35 = dma.hbm_to_vmem [thread:$0]  %s1, 2048, %s30, [#allocation7], 128, 128, 8
    $region9: #{tpu_custom_call.1} parent=1 // pred_fallthru
      _
    // Predicated region
    $region10: #{tpu_custom_call.1} parent=1 // pred_check
      _
    $region11: #{tpu_custom_call.1} parent=1 // pred_check_branch
      %37 = sbr.rel (0) target = $region13
    $region12: #{tpu_custom_call.1} parent=1 // pred_region
      %s39 = ssub.s32 512, 512
      %40 = vsyncadd [#allocation7], %s39
      %s41 = sshll.u32 [#allocation8], 4
      %s42 = int_to_ptr.vmem [resolvable:$true] %s41
      %47 = dma.hbm_to_vmem [thread:$0]  %s2, 512, %s42, [#allocation7], 128, 128, 8
    $region13: #{tpu_custom_call.1} parent=1 // pred_fallthru
      _
    // Predicated region
    $region14: #{tpu_custom_call.1} parent=1 // pred_check
      _
    $region15: #{tpu_custom_call.1} parent=1 // pred_check_branch
      %49 = sbr.rel (0) target = $region17
    $region16: #{tpu_custom_call.1} parent=1 // pred_region
      %s51 = ssub.s32 16384, 16384
      %52 = vsyncadd [#allocation10], %s51
      %s53 = sshll.u32 [#allocation9], 4
      %s54 = int_to_ptr.vmem [resolvable:$true] %s53
      %59 = dma.hbm_to_vmem [thread:$0]  %s3, 16384, %s54, [#allocation10], 1024, 1024, 64
    $region17: #{tpu_custom_call.1} parent=1 // pred_fallthru
      _
    // Predicated region
    $region18: #{tpu_custom_call.1} parent=1 // pred_check
      _
    $region19: #{tpu_custom_call.1} parent=1 // pred_check_branch
      %61 = sbr.rel (0) target = $region21
    $region20: #{tpu_custom_call.1} parent=1 // pred_region
      %s63 = ssub.s32 4096, 4096
      %64 = vsyncadd [#allocation10], %s63
      %s65 = sshll.u32 [#allocation11], 4
      %s66 = int_to_ptr.vmem [resolvable:$true] %s65
      %71 = dma.hbm_to_vmem [thread:$0]  %s4, 4096, %s66, [#allocation10], 1024, 1024, 64
    $region21: #{tpu_custom_call.1} parent=1 // pred_fallthru
      _
    // Predicated region
    $region22: #{tpu_custom_call.1} parent=1 // pred_check
      _
    $region23: #{tpu_custom_call.1} parent=1 // pred_check_branch
      %73 = sbr.rel (0) target = $region25
    $region24: #{tpu_custom_call.1} parent=1 // pred_region
      %74 = dma.done [#allocation4], 128
    $region25: #{tpu_custom_call.1} parent=1 // pred_fallthru
      _
    // Predicated region
    $region26: #{tpu_custom_call.1} parent=1 // pred_check
      _
    $region27: #{tpu_custom_call.1} parent=1 // pred_check_branch
      %76 = sbr.rel (0) target = $region29
    $region28: #{tpu_custom_call.1} parent=1 // pred_region
      %77 = dma.done [#allocation7], 2048
    $region29: #{tpu_custom_call.1} parent=1 // pred_fallthru
      _
    // Predicated region
    $region30: #{tpu_custom_call.1} parent=1 // pred_check
      _
    $region31: #{tpu_custom_call.1} parent=1 // pred_check_branch
      %79 = sbr.rel (0) target = $region33
    $region32: #{tpu_custom_call.1} parent=1 // pred_region
      %80 = dma.done [#allocation7], 512
    $region33: #{tpu_custom_call.1} parent=1 // pred_fallthru
      _
    // Predicated region
    $region34: #{tpu_custom_call.1} parent=1 // pred_check
      _
    $region35: #{tpu_custom_call.1} parent=1 // pred_check_branch
      %82 = sbr.rel (0) target = $region37
    $region36: #{tpu_custom_call.1} parent=1 // pred_region
      %83 = dma.done [#allocation10], 16384
    $region37: #{tpu_custom_call.1} parent=1 // pred_fallthru
      _
    // Predicated region
    $region38: #{tpu_custom_call.1} parent=1 // pred_check
      _
    $region39: #{tpu_custom_call.1} parent=1 // pred_check_branch
      %85 = sbr.rel (0) target = $region41
    $region40: #{tpu_custom_call.1} parent=1 // pred_region
      %86 = dma.done [#allocation10], 4096
    $region41: #{tpu_custom_call.1} parent=1 // pred_fallthru
      _
    %p87 = scmp.eq.s32.totalorder 0, 0
    // Predicated region
    $region42: #{tpu_custom_call.1} parent=1 // pred_check
      %p88 = pneg %p87
    $region43: #{tpu_custom_call.1} parent=1 // pred_check_branch
      %90 = sbr.rel (%p88) target = $region45
    $region44: #{tpu_custom_call.1} parent=1 // pred_region
      %91 = vst [vmem:[#allocation2] sm:$0xff] 0.0
    $region45: #{tpu_custom_call.1} parent=1 // pred_fallthru
      _
    %v92 = vld [vmem:[#allocation6] sm:$0xff]
    %v93 = vld [vmem:[#allocation6 + $0x8] sm:$0xff]
    %v94 = vld [vmem:[#allocation6 + $0x10] sm:$0xff]
    %v95 = vld [vmem:[#allocation6 + $0x18] sm:$0xff]
    %v96 = vld [vmem:[#allocation6 + $0x20] sm:$0xff]
    %v97 = vld [vmem:[#allocation6 + $0x28] sm:$0xff]
    %v98 = vld [vmem:[#allocation6 + $0x30] sm:$0xff]
    %v99 = vld [vmem:[#allocation6 + $0x38] sm:$0xff]
    %v100 = vld [vmem:[#allocation6 + $0x40] sm:$0xff]
    %v101 = vld [vmem:[#allocation6 + $0x48] sm:$0xff]
    %v102 = vld [vmem:[#allocation6 + $0x50] sm:$0xff]
    %v103 = vld [vmem:[#allocation6 + $0x58] sm:$0xff]
    %v104 = vld [vmem:[#allocation6 + $0x60] sm:$0xff]
    %v105 = vld [vmem:[#allocation6 + $0x68] sm:$0xff]
    %v106 = vld [vmem:[#allocation6 + $0x70] sm:$0xff]
    %v107 = vld [vmem:[#allocation6 + $0x78] sm:$0xff]
    %v108 = vld [vmem:[#allocation8] sm:$0xff]
    %v109 = vld [vmem:[#allocation8 + $0x8] sm:$0xff]
    %v110 = vld [vmem:[#allocation8 + $0x10] sm:$0xff]
    %v111 = vld [vmem:[#allocation8 + $0x18] sm:$0xff]
    %v112 = vld [vmem:[#allocation9] sm:$0xff]
    %v113 = vld [vmem:[#allocation9 + $0x8] sm:$0xff]
    %v114 = vld [vmem:[#allocation9 + $0x10] sm:$0xff]
    %v115 = vld [vmem:[#allocation9 + $0x18] sm:$0xff]
    %v116 = vld [vmem:[#allocation9 + $0x20] sm:$0xff]
    %v117 = vld [vmem:[#allocation9 + $0x28] sm:$0xff]
    %v118 = vld [vmem:[#allocation9 + $0x30] sm:$0xff]
    %v119 = vld [vmem:[#allocation9 + $0x38] sm:$0xff]
    %v120 = vld [vmem:[#allocation9 + $0x40] sm:$0xff]
    %v121 = vld [vmem:[#allocation9 + $0x48] sm:$0xff]
    %v122 = vld [vmem:[#allocation9 + $0x50] sm:$0xff]
    %v123 = vld [vmem:[#allocation9 + $0x58] sm:$0xff]
    %v124 = vld [vmem:[#allocation9 + $0x60] sm:$0xff]
    %v125 = vld [vmem:[#allocation9 + $0x68] sm:$0xff]
    %v126 = vld [vmem:[#allocation9 + $0x70] sm:$0xff]
    %v127 = vld [vmem:[#allocation9 + $0x78] sm:$0xff]
    %v128 = vld [vmem:[#allocation9 + $0x80] sm:$0xff]
    %v129 = vld [vmem:[#allocation9 + $0x88] sm:$0xff]
    %v130 = vld [vmem:[#allocation9 + $0x90] sm:$0xff]
    %v131 = vld [vmem:[#allocation9 + $0x98] sm:$0xff]
    %v132 = vld [vmem:[#allocation9 + $0xa0] sm:$0xff]
    %v133 = vld [vmem:[#allocation9 + $0xa8] sm:$0xff]
    %v134 = vld [vmem:[#allocation9 + $0xb0] sm:$0xff]
    %v135 = vld [vmem:[#allocation9 + $0xb8] sm:$0xff]
    %v136 = vld [vmem:[#allocation9 + $0xc0] sm:$0xff]
    %v137 = vld [vmem:[#allocation9 + $0xc8] sm:$0xff]
    %v138 = vld [vmem:[#allocation9 + $0xd0] sm:$0xff]
    %v139 = vld [vmem:[#allocation9 + $0xd8] sm:$0xff]
    %v140 = vld [vmem:[#allocation9 + $0xe0] sm:$0xff]
    %v141 = vld [vmem:[#allocation9 + $0xe8] sm:$0xff]
    %v142 = vld [vmem:[#allocation9 + $0xf0] sm:$0xff]
    %v143 = vld [vmem:[#allocation9 + $0xf8] sm:$0xff]
    %v144 = vld [vmem:[#allocation9 + $0x100] sm:$0xff]
    %v145 = vld [vmem:[#allocation9 + $0x108] sm:$0xff]
    %v146 = vld [vmem:[#allocation9 + $0x110] sm:$0xff]
    %v147 = vld [vmem:[#allocation9 + $0x118] sm:$0xff]
    %v148 = vld [vmem:[#allocation9 + $0x120] sm:$0xff]
    %v149 = vld [vmem:[#allocation9 + $0x128] sm:$0xff]
    %v150 = vld [vmem:[#allocation9 + $0x130] sm:$0xff]
    %v151 = vld [vmem:[#allocation9 + $0x138] sm:$0xff]
    %v152 = vld [vmem:[#allocation9 + $0x140] sm:$0xff]
    %v153 = vld [vmem:[#allocation9 + $0x148] sm:$0xff]
    %v154 = vld [vmem:[#allocation9 + $0x150] sm:$0xff]
    %v155 = vld [vmem:[#allocation9 + $0x158] sm:$0xff]
    %v156 = vld [vmem:[#allocation9 + $0x160] sm:$0xff]
    %v157 = vld [vmem:[#allocation9 + $0x168] sm:$0xff]
    %v158 = vld [vmem:[#allocation9 + $0x170] sm:$0xff]
    %v159 = vld [vmem:[#allocation9 + $0x178] sm:$0xff]
    %v160 = vld [vmem:[#allocation9 + $0x180] sm:$0xff]
    %v161 = vld [vmem:[#allocation9 + $0x188] sm:$0xff]
    %v162 = vld [vmem:[#allocation9 + $0x190] sm:$0xff]
    %v163 = vld [vmem:[#allocation9 + $0x198] sm:$0xff]
    %v164 = vld [vmem:[#allocation9 + $0x1a0] sm:$0xff]
    %v165 = vld [vmem:[#allocation9 + $0x1a8] sm:$0xff]
    %v166 = vld [vmem:[#allocation9 + $0x1b0] sm:$0xff]
    %v167 = vld [vmem:[#allocation9 + $0x1b8] sm:$0xff]
    %v168 = vld [vmem:[#allocation9 + $0x1c0] sm:$0xff]
    %v169 = vld [vmem:[#allocation9 + $0x1c8] sm:$0xff]
    %v170 = vld [vmem:[#allocation9 + $0x1d0] sm:$0xff]
    %v171 = vld [vmem:[#allocation9 + $0x1d8] sm:$0xff]
    %v172 = vld [vmem:[#allocation9 + $0x1e0] sm:$0xff]
    %v173 = vld [vmem:[#allocation9 + $0x1e8] sm:$0xff]
    %v174 = vld [vmem:[#allocation9 + $0x1f0] sm:$0xff]
    %v175 = vld [vmem:[#allocation9 + $0x1f8] sm:$0xff]
    %v176 = vld [vmem:[#allocation9 + $0x200] sm:$0xff]
    %v177 = vld [vmem:[#allocation9 + $0x208] sm:$0xff]
    %v178 = vld [vmem:[#allocation9 + $0x210] sm:$0xff]
    %v179 = vld [vmem:[#allocation9 + $0x218] sm:$0xff]
    %v180 = vld [vmem:[#allocation9 + $0x220] sm:$0xff]
    %v181 = vld [vmem:[#allocation9 + $0x228] sm:$0xff]
    %v182 = vld [vmem:[#allocation9 + $0x230] sm:$0xff]
    %v183 = vld [vmem:[#allocation9 + $0x238] sm:$0xff]
    %v184 = vld [vmem:[#allocation9 + $0x240] sm:$0xff]
    %v185 = vld [vmem:[#allocation9 + $0x248] sm:$0xff]
    %v186 = vld [vmem:[#allocation9 + $0x250] sm:$0xff]
    %v187 = vld [vmem:[#allocation9 + $0x258] sm:$0xff]
    %v188 = vld [vmem:[#allocation9 + $0x260] sm:$0xff]
    %v189 = vld [vmem:[#allocation9 + $0x268] sm:$0xff]
    %v190 = vld [vmem:[#allocation9 + $0x270] sm:$0xff]
    %v191 = vld [vmem:[#allocation9 + $0x278] sm:$0xff]
    %v192 = vld [vmem:[#allocation9 + $0x280] sm:$0xff]
    %v193 = vld [vmem:[#allocation9 + $0x288] sm:$0xff]
    %v194 = vld [vmem:[#allocation9 + $0x290] sm:$0xff]
    %v195 = vld [vmem:[#allocation9 + $0x298] sm:$0xff]
    %v196 = vld [vmem:[#allocation9 + $0x2a0] sm:$0xff]
    %v197 = vld [vmem:[#allocation9 + $0x2a8] sm:$0xff]
    %v198 = vld [vmem:[#allocation9 + $0x2b0] sm:$0xff]
    %v199 = vld [vmem:[#allocation9 + $0x2b8] sm:$0xff]
    %v200 = vld [vmem:[#allocation9 + $0x2c0] sm:$0xff]
    %v201 = vld [vmem:[#allocation9 + $0x2c8] sm:$0xff]
    %v202 = vld [vmem:[#allocation9 + $0x2d0] sm:$0xff]
    %v203 = vld [vmem:[#allocation9 + $0x2d8] sm:$0xff]
    %v204 = vld [vmem:[#allocation9 + $0x2e0] sm:$0xff]
    %v205 = vld [vmem:[#allocation9 + $0x2e8] sm:$0xff]
    %v206 = vld [vmem:[#allocation9 + $0x2f0] sm:$0xff]
    %v207 = vld [vmem:[#allocation9 + $0x2f8] sm:$0xff]
    %v208 = vld [vmem:[#allocation9 + $0x300] sm:$0xff]
    %v209 = vld [vmem:[#allocation9 + $0x308] sm:$0xff]
    %v210 = vld [vmem:[#allocation9 + $0x310] sm:$0xff]
    %v211 = vld [vmem:[#allocation9 + $0x318] sm:$0xff]
    %v212 = vld [vmem:[#allocation9 + $0x320] sm:$0xff]
    %v213 = vld [vmem:[#allocation9 + $0x328] sm:$0xff]
    %v214 = vld [vmem:[#allocation9 + $0x330] sm:$0xff]
    %v215 = vld [vmem:[#allocation9 + $0x338] sm:$0xff]
    %v216 = vld [vmem:[#allocation9 + $0x340] sm:$0xff]
    %v217 = vld [vmem:[#allocation9 + $0x348] sm:$0xff]
    %v218 = vld [vmem:[#allocation9 + $0x350] sm:$0xff]
    %v219 = vld [vmem:[#allocation9 + $0x358] sm:$0xff]
    %v220 = vld [vmem:[#allocation9 + $0x360] sm:$0xff]
    %v221 = vld [vmem:[#allocation9 + $0x368] sm:$0xff]
    %v222 = vld [vmem:[#allocation9 + $0x370] sm:$0xff]
    %v223 = vld [vmem:[#allocation9 + $0x378] sm:$0xff]
    %v224 = vld [vmem:[#allocation9 + $0x380] sm:$0xff]
    %v225 = vld [vmem:[#allocation9 + $0x388] sm:$0xff]
    %v226 = vld [vmem:[#allocation9 + $0x390] sm:$0xff]
    %v227 = vld [vmem:[#allocation9 + $0x398] sm:$0xff]
    %v228 = vld [vmem:[#allocation9 + $0x3a0] sm:$0xff]
    %v229 = vld [vmem:[#allocation9 + $0x3a8] sm:$0xff]
    %v230 = vld [vmem:[#allocation9 + $0x3b0] sm:$0xff]
    %v231 = vld [vmem:[#allocation9 + $0x3b8] sm:$0xff]
    %v232 = vld [vmem:[#allocation9 + $0x3c0] sm:$0xff]
    %v233 = vld [vmem:[#allocation9 + $0x3c8] sm:$0xff]
    %v234 = vld [vmem:[#allocation9 + $0x3d0] sm:$0xff]
    %v235 = vld [vmem:[#allocation9 + $0x3d8] sm:$0xff]
    %v236 = vld [vmem:[#allocation9 + $0x3e0] sm:$0xff]
    %v237 = vld [vmem:[#allocation9 + $0x3e8] sm:$0xff]
    %v238 = vld [vmem:[#allocation9 + $0x3f0] sm:$0xff]
    %v239 = vld [vmem:[#allocation9 + $0x3f8] sm:$0xff]
    %v240 = vld [vmem:[#allocation11] sm:$0xff]
    %v241 = vld [vmem:[#allocation11 + $0x8] sm:$0xff]
    %v242 = vld [vmem:[#allocation11 + $0x10] sm:$0xff]
    %v243 = vld [vmem:[#allocation11 + $0x18] sm:$0xff]
    %v244 = vld [vmem:[#allocation11 + $0x20] sm:$0xff]
    %v245 = vld [vmem:[#allocation11 + $0x28] sm:$0xff]
    %v246 = vld [vmem:[#allocation11 + $0x30] sm:$0xff]
    %v247 = vld [vmem:[#allocation11 + $0x38] sm:$0xff]
    %v248 = vld [vmem:[#allocation11 + $0x40] sm:$0xff]
    %v249 = vld [vmem:[#allocation11 + $0x48] sm:$0xff]
    %v250 = vld [vmem:[#allocation11 + $0x50] sm:$0xff]
    %v251 = vld [vmem:[#allocation11 + $0x58] sm:$0xff]
    %v252 = vld [vmem:[#allocation11 + $0x60] sm:$0xff]
    %v253 = vld [vmem:[#allocation11 + $0x68] sm:$0xff]
    %v254 = vld [vmem:[#allocation11 + $0x70] sm:$0xff]
    %v255 = vld [vmem:[#allocation11 + $0x78] sm:$0xff]
    %v256 = vld [vmem:[#allocation11 + $0x80] sm:$0xff]
    %v257 = vld [vmem:[#allocation11 + $0x88] sm:$0xff]
    %v258 = vld [vmem:[#allocation11 + $0x90] sm:$0xff]
    %v259 = vld [vmem:[#allocation11 + $0x98] sm:$0xff]
    %v260 = vld [vmem:[#allocation11 + $0xa0] sm:$0xff]
    %v261 = vld [vmem:[#allocation11 + $0xa8] sm:$0xff]
    %v262 = vld [vmem:[#allocation11 + $0xb0] sm:$0xff]
    %v263 = vld [vmem:[#allocation11 + $0xb8] sm:$0xff]
    %v264 = vld [vmem:[#allocation11 + $0xc0] sm:$0xff]
    %v265 = vld [vmem:[#allocation11 + $0xc8] sm:$0xff]
    %v266 = vld [vmem:[#allocation11 + $0xd0] sm:$0xff]
    %v267 = vld [vmem:[#allocation11 + $0xd8] sm:$0xff]
    %v268 = vld [vmem:[#allocation11 + $0xe0] sm:$0xff]
    %v269 = vld [vmem:[#allocation11 + $0xe8] sm:$0xff]
    %v270 = vld [vmem:[#allocation11 + $0xf0] sm:$0xff]
    %v271 = vld [vmem:[#allocation11 + $0xf8] sm:$0xff]
    %v272 = vld [vmem:[#allocation2] sm:$0xff]
    %v273 = vld [vmem:[#allocation3] sm:$0xff]
    %vm274 = vcmask 261120
    %v276 = vsel %vm274, %v273, 0
    %278 = vmatprep.subr.mxu0 0.0
    %279 = vmatpush1.msra.mxu0 0.0
    %280 = vmatprep.subr.mxu0 0.0
    %281 = vmatpush1.msra.mxu0 0.0
    %282 = vmatprep.subr.mxu0 0.0
    %283 = vmatpush1.msra.mxu0 0.0
    %284 = vmatprep.subr.mxu0 0.0
    %285 = vmatpush1.msra.mxu0 0.0
    %286 = vmatprep.subr.mxu0 0.0
    %287 = vmatpush1.msra.mxu0 0.0
    %288 = vmatprep.subr.mxu0 0.0
    %289 = vmatpush1.msra.mxu0 0.0
    %290 = vmatprep.subr.mxu0 0.0
    %291 = vmatpush1.msra.mxu0 0.0
    %292 = vmatprep.subr.mxu0 0.0
    %293 = vmatpush1.msra.mxu0 0.0
    %294 = vmatprep.subr.mxu0 0.0
    %295 = vmatpush1.msra.mxu0 0.0
    %296 = vmatprep.subr.mxu0 0.0
    %297 = vmatpush1.msra.mxu0 0.0
    %298 = vmatprep.subr.mxu0 0.0
    %299 = vmatpush1.msra.mxu0 0.0
    %300 = vmatprep.subr.mxu0 0.0
    %301 = vmatpush1.msra.mxu0 0.0
    %302 = vmatprep.subr.mxu0 %v265
    %303 = vmatpush1.msra.mxu0 %v264
    %304 = vmatprep.subr.mxu0 %v257
    %305 = vmatpush1.msra.mxu0 %v256
    %306 = vmatprep.subr.mxu0 %v249
    %307 = vmatpush1.msra.mxu0 %v248
    %308 = vmatprep.subr.mxu0 %v241
    %309 = vmatpush1.msra.mxu0 %v240
    %310 = vmatprep.subr.mxu0 0.0
    %311 = vmatpush2.msra.mxu0 0.0
    %312 = vmatprep.subr.mxu0 0.0
    %313 = vmatpush2.msra.mxu0 0.0
    %314 = vmatprep.subr.mxu0 0.0
    %315 = vmatpush2.msra.mxu0 0.0
    %316 = vmatprep.subr.mxu0 0.0
    %317 = vmatpush2.msra.mxu0 0.0
    %318 = vmatprep.subr.mxu0 0.0
    %319 = vmatpush2.msra.mxu0 0.0
    %320 = vmatprep.subr.mxu0 0.0
    %321 = vmatpush2.msra.mxu0 0.0
    %322 = vmatprep.subr.mxu0 0.0
    %323 = vmatpush2.msra.mxu0 0.0
    %324 = vmatprep.subr.mxu0 0.0
    %325 = vmatpush2.msra.mxu0 0.0
    %326 = vmatprep.subr.mxu0 0.0
    %327 = vmatpush2.msra.mxu0 0.0
    %328 = vmatprep.subr.mxu0 0.0
    %329 = vmatpush2.msra.mxu0 0.0
    %330 = vmatprep.subr.mxu0 0.0
    %331 = vmatpush2.msra.mxu0 0.0
    %332 = vmatprep.subr.mxu0 0.0
    %333 = vmatpush2.msra.mxu0 0.0
    %334 = vmatprep.subr.mxu0 0.0
    %335 = vmatpush2.msra.mxu0 0.0
    %336 = vmatprep.subr.mxu0 0.0
    %337 = vmatpush2.msra.mxu0 0.0
    %338 = vmatprep.subr.mxu0 0.0
    %339 = vmatpush2.msra.mxu0 0.0
    %340 = vmatprep.subr.mxu0 0.0
    %341 = vmatpush2.msra.mxu0 0.0
    %342 = vmatprep.mubr.f32.mxu0 0.0
    %343 = vmatmul.mubr.f32.gmra.mxu0 %v276
    %v344 = vpop.f32.mrf.mxu0
    %v345 = vadd.f32 0.0, %v344
    %v346 = vpop.f32.mrf.mxu0
    %v347 = vadd.f32 0.0, %v346
    %348 = vdwg.mxu0
    %349 = vmatprep.subr.mxu0 0.0
    %350 = vmatpush1.msra.mxu0 0.0
    %351 = vmatprep.subr.mxu0 0.0
    %352 = vmatpush1.msra.mxu0 0.0
    %353 = vmatprep.subr.mxu0 0.0
    %354 = vmatpush1.msra.mxu0 0.0
    %355 = vmatprep.subr.mxu0 0.0
    %356 = vmatpush1.msra.mxu0 0.0
    %357 = vmatprep.subr.mxu0 0.0
    %358 = vmatpush1.msra.mxu0 0.0
    %359 = vmatprep.subr.mxu0 0.0
    %360 = vmatpush1.msra.mxu0 0.0
    %361 = vmatprep.subr.mxu0 0.0
    %362 = vmatpush1.msra.mxu0 0.0
    %363 = vmatprep.subr.mxu0 0.0
    %364 = vmatpush1.msra.mxu0 0.0
    %365 = vmatprep.subr.mxu0 0.0
    %366 = vmatpush1.msra.mxu0 0.0
    %367 = vmatprep.subr.mxu0 0.0
    %368 = vmatpush1.msra.mxu0 0.0
    %369 = vmatprep.subr.mxu0 0.0
    %370 = vmatpush1.msra.mxu0 0.0
    %371 = vmatprep.subr.mxu0 0.0
    %372 = vmatpush1.msra.mxu0 0.0
    %373 = vmatprep.subr.mxu0 %v267
    %374 = vmatpush1.msra.mxu0 %v266
    %375 = vmatprep.subr.mxu0 %v259
    %376 = vmatpush1.msra.mxu0 %v258
    %377 = vmatprep.subr.mxu0 %v251
    %378 = vmatpush1.msra.mxu0 %v250
    %379 = vmatprep.subr.mxu0 %v243
    %380 = vmatpush1.msra.mxu0 %v242
    %381 = vmatprep.subr.mxu0 0.0
    %382 = vmatpush2.msra.mxu0 0.0
    %383 = vmatprep.subr.mxu0 0.0
    %384 = vmatpush2.msra.mxu0 0.0
    %385 = vmatprep.subr.mxu0 0.0
    %386 = vmatpush2.msra.mxu0 0.0
    %387 = vmatprep.subr.mxu0 0.0
    %388 = vmatpush2.msra.mxu0 0.0
    %389 = vmatprep.subr.mxu0 0.0
    %390 = vmatpush2.msra.mxu0 0.0
    %391 = vmatprep.subr.mxu0 0.0
    %392 = vmatpush2.msra.mxu0 0.0
    %393 = vmatprep.subr.mxu0 0.0
    %394 = vmatpush2.msra.mxu0 0.0
    %395 = vmatprep.subr.mxu0 0.0
    %396 = vmatpush2.msra.mxu0 0.0
    %397 = vmatprep.subr.mxu0 0.0
    %398 = vmatpush2.msra.mxu0 0.0
    %399 = vmatprep.subr.mxu0 0.0
    %400 = vmatpush2.msra.mxu0 0.0
    %401 = vmatprep.subr.mxu0 0.0
    %402 = vmatpush2.msra.mxu0 0.0
    %403 = vmatprep.subr.mxu0 0.0
    %404 = vmatpush2.msra.mxu0 0.0
    %405 = vmatprep.subr.mxu0 0.0
    %406 = vmatpush2.msra.mxu0 0.0
    %407 = vmatprep.subr.mxu0 0.0
    %408 = vmatpush2.msra.mxu0 0.0
    %409 = vmatprep.subr.mxu0 0.0
    %410 = vmatpush2.msra.mxu0 0.0
    %411 = vmatprep.subr.mxu0 0.0
    %412 = vmatpush2.msra.mxu0 0.0
    %413 = vmatprep.mubr.f32.mxu0 0.0
    %414 = vmatmul.mubr.f32.gmra.mxu0 %v276
    %v415 = vpop.f32.mrf.mxu0
    %v416 = vadd.f32 0.0, %v415
    %v417 = vpop.f32.mrf.mxu0
    %v418 = vadd.f32 0.0, %v417
    %419 = vdwg.mxu0
    %420 = vmatprep.subr.mxu0 0.0
    %421 = vmatpush1.msra.mxu0 0.0
    %422 = vmatprep.subr.mxu0 0.0
    %423 = vmatpush1.msra.mxu0 0.0
    %424 = vmatprep.subr.mxu0 0.0
    %425 = vmatpush1.msra.mxu0 0.0
    %426 = vmatprep.subr.mxu0 0.0
    %427 = vmatpush1.msra.mxu0 0.0
    %428 = vmatprep.subr.mxu0 0.0
    %429 = vmatpush1.msra.mxu0 0.0
    %430 = vmatprep.subr.mxu0 0.0
    %431 = vmatpush1.msra.mxu0 0.0
    %432 = vmatprep.subr.mxu0 0.0
    %433 = vmatpush1.msra.mxu0 0.0
    %434 = vmatprep.subr.mxu0 0.0
    %435 = vmatpush1.msra.mxu0 0.0
    %436 = vmatprep.subr.mxu0 0.0
    %437 = vmatpush1.msra.mxu0 0.0
    %438 = vmatprep.subr.mxu0 0.0
    %439 = vmatpush1.msra.mxu0 0.0
    %440 = vmatprep.subr.mxu0 0.0
    %441 = vmatpush1.msra.mxu0 0.0
    %442 = vmatprep.subr.mxu0 0.0
    %443 = vmatpush1.msra.mxu0 0.0
    %444 = vmatprep.subr.mxu0 %v269
    %445 = vmatpush1.msra.mxu0 %v268
    %446 = vmatprep.subr.mxu0 %v261
    %447 = vmatpush1.msra.mxu0 %v260
    %448 = vmatprep.subr.mxu0 %v253
    %449 = vmatpush1.msra.mxu0 %v252
    %450 = vmatprep.subr.mxu0 %v245
    %451 = vmatpush1.msra.mxu0 %v244
    %452 = vmatprep.subr.mxu0 0.0
    %453 = vmatpush2.msra.mxu0 0.0
    %454 = vmatprep.subr.mxu0 0.0
    %455 = vmatpush2.msra.mxu0 0.0
    %456 = vmatprep.subr.mxu0 0.0
    %457 = vmatpush2.msra.mxu0 0.0
    %458 = vmatprep.subr.mxu0 0.0
    %459 = vmatpush2.msra.mxu0 0.0
    %460 = vmatprep.subr.mxu0 0.0
    %461 = vmatpush2.msra.mxu0 0.0
    %462 = vmatprep.subr.mxu0 0.0
    %463 = vmatpush2.msra.mxu0 0.0
    %464 = vmatprep.subr.mxu0 0.0
    %465 = vmatpush2.msra.mxu0 0.0
    %466 = vmatprep.subr.mxu0 0.0
    %467 = vmatpush2.msra.mxu0 0.0
    %468 = vmatprep.subr.mxu0 0.0
    %469 = vmatpush2.msra.mxu0 0.0
    %470 = vmatprep.subr.mxu0 0.0
    %471 = vmatpush2.msra.mxu0 0.0
    %472 = vmatprep.subr.mxu0 0.0
    %473 = vmatpush2.msra.mxu0 0.0
    %474 = vmatprep.subr.mxu0 0.0
    %475 = vmatpush2.msra.mxu0 0.0
    %476 = vmatprep.subr.mxu0 0.0
    %477 = vmatpush2.msra.mxu0 0.0
    %478 = vmatprep.subr.mxu0 0.0
    %479 = vmatpush2.msra.mxu0 0.0
    %480 = vmatprep.subr.mxu0 0.0
    %481 = vmatpush2.msra.mxu0 0.0
    %482 = vmatprep.subr.mxu0 0.0
    %483 = vmatpush2.msra.mxu0 0.0
    %484 = vmatprep.mubr.f32.mxu0 0.0
    %485 = vmatmul.mubr.f32.gmra.mxu0 %v276
    %v486 = vpop.f32.mrf.mxu0
    %v487 = vadd.f32 0.0, %v486
    %v488 = vpop.f32.mrf.mxu0
    %v489 = vadd.f32 0.0, %v488
    %490 = vdwg.mxu0
    %491 = vmatprep.subr.mxu0 0.0
    %492 = vmatpush1.msra.mxu0 0.0
    %493 = vmatprep.subr.mxu0 0.0
    %494 = vmatpush1.msra.mxu0 0.0
    %495 = vmatprep.subr.mxu0 0.0
    %496 = vmatpush1.msra.mxu0 0.0
    %497 = vmatprep.subr.mxu0 0.0
    %498 = vmatpush1.msra.mxu0 0.0
    %499 = vmatprep.subr.mxu0 0.0
    %500 = vmatpush1.msra.mxu0 0.0
    %501 = vmatprep.subr.mxu0 0.0
    %502 = vmatpush1.msra.mxu0 0.0
    %503 = vmatprep.subr.mxu0 0.0
    %504 = vmatpush1.msra.mxu0 0.0
    %505 = vmatprep.subr.mxu0 0.0
    %506 = vmatpush1.msra.mxu0 0.0
    %507 = vmatprep.subr.mxu0 0.0
    %508 = vmatpush1.msra.mxu0 0.0
    %509 = vmatprep.subr.mxu0 0.0
    %510 = vmatpush1.msra.mxu0 0.0
    %511 = vmatprep.subr.mxu0 0.0
    %512 = vmatpush1.msra.mxu0 0.0
    %513 = vmatprep.subr.mxu0 0.0
    %514 = vmatpush1.msra.mxu0 0.0
    %515 = vmatprep.subr.mxu0 %v271
    %516 = vmatpush1.msra.mxu0 %v270
    %517 = vmatprep.subr.mxu0 %v263
    %518 = vmatpush1.msra.mxu0 %v262
    %519 = vmatprep.subr.mxu0 %v255
    %520 = vmatpush1.msra.mxu0 %v254
    %521 = vmatprep.subr.mxu0 %v247
    %522 = vmatpush1.msra.mxu0 %v246
    %523 = vmatprep.subr.mxu0 0.0
    %524 = vmatpush2.msra.mxu0 0.0
    %525 = vmatprep.subr.mxu0 0.0
    %526 = vmatpush2.msra.mxu0 0.0
    %527 = vmatprep.subr.mxu0 0.0
    %528 = vmatpush2.msra.mxu0 0.0
    %529 = vmatprep.subr.mxu0 0.0
    %530 = vmatpush2.msra.mxu0 0.0
    %531 = vmatprep.subr.mxu0 0.0
    %532 = vmatpush2.msra.mxu0 0.0
    %533 = vmatprep.subr.mxu0 0.0
    %534 = vmatpush2.msra.mxu0 0.0
    %535 = vmatprep.subr.mxu0 0.0
    %536 = vmatpush2.msra.mxu0 0.0
    %537 = vmatprep.subr.mxu0 0.0
    %538 = vmatpush2.msra.mxu0 0.0
    %539 = vmatprep.subr.mxu0 0.0
    %540 = vmatpush2.msra.mxu0 0.0
    %541 = vmatprep.subr.mxu0 0.0
    %542 = vmatpush2.msra.mxu0 0.0
    %543 = vmatprep.subr.mxu0 0.0
    %544 = vmatpush2.msra.mxu0 0.0
    %545 = vmatprep.subr.mxu0 0.0
    %546 = vmatpush2.msra.mxu0 0.0
    %547 = vmatprep.subr.mxu0 0.0
    %548 = vmatpush2.msra.mxu0 0.0
    %549 = vmatprep.subr.mxu0 0.0
    %550 = vmatpush2.msra.mxu0 0.0
    %551 = vmatprep.subr.mxu0 0.0
    %552 = vmatpush2.msra.mxu0 0.0
    %553 = vmatprep.subr.mxu0 0.0
    %554 = vmatpush2.msra.mxu0 0.0
    %555 = vmatprep.mubr.f32.mxu0 0.0
    %556 = vmatmul.mubr.f32.gmra.mxu0 %v276
    %v557 = vpop.f32.mrf.mxu0
    %v558 = vadd.f32 0.0, %v557
    %v559 = vpop.f32.mrf.mxu0
    %v560 = vadd.f32 0.0, %v559
    %561 = vdwg.mxu0
    %562 = vmatprep.subr.mxu0 %v233
    %563 = vmatpush1.msra.mxu0 %v232
    %564 = vmatprep.subr.mxu0 %v225
    %565 = vmatpush1.msra.mxu0 %v224
    %566 = vmatprep.subr.mxu0 %v217
    %567 = vmatpush1.msra.mxu0 %v216
    %568 = vmatprep.subr.mxu0 %v209
    %569 = vmatpush1.msra.mxu0 %v208
    %570 = vmatprep.subr.mxu0 %v201
    %571 = vmatpush1.msra.mxu0 %v200
    %572 = vmatprep.subr.mxu0 %v193
    %573 = vmatpush1.msra.mxu0 %v192
    %574 = vmatprep.subr.mxu0 %v185
    %575 = vmatpush1.msra.mxu0 %v184
    %576 = vmatprep.subr.mxu0 %v177
    %577 = vmatpush1.msra.mxu0 %v176
    %578 = vmatprep.subr.mxu0 %v169
    %579 = vmatpush1.msra.mxu0 %v168
    %580 = vmatprep.subr.mxu0 %v161
    %581 = vmatpush1.msra.mxu0 %v160
    %582 = vmatprep.subr.mxu0 %v153
    %583 = vmatpush1.msra.mxu0 %v152
    %584 = vmatprep.subr.mxu0 %v145
    %585 = vmatpush1.msra.mxu0 %v144
    %586 = vmatprep.subr.mxu0 %v137
    %587 = vmatpush1.msra.mxu0 %v136
    %588 = vmatprep.subr.mxu0 %v129
    %589 = vmatpush1.msra.mxu0 %v128
    %590 = vmatprep.subr.mxu0 %v121
    %591 = vmatpush1.msra.mxu0 %v120
    %592 = vmatprep.subr.mxu0 %v113
    %593 = vmatpush1.msra.mxu0 %v112
    %594 = vmatprep.subr.mxu0 0.0
    %595 = vmatpush2.msra.mxu0 0.0
    %596 = vmatprep.subr.mxu0 0.0
    %597 = vmatpush2.msra.mxu0 0.0
    %598 = vmatprep.subr.mxu0 0.0
    %599 = vmatpush2.msra.mxu0 0.0
    %600 = vmatprep.subr.mxu0 0.0
    %601 = vmatpush2.msra.mxu0 0.0
    %602 = vmatprep.subr.mxu0 0.0
    %603 = vmatpush2.msra.mxu0 0.0
    %604 = vmatprep.subr.mxu0 0.0
    %605 = vmatpush2.msra.mxu0 0.0
    %606 = vmatprep.subr.mxu0 0.0
    %607 = vmatpush2.msra.mxu0 0.0
    %608 = vmatprep.subr.mxu0 0.0
    %609 = vmatpush2.msra.mxu0 0.0
    %610 = vmatprep.subr.mxu0 0.0
    %611 = vmatpush2.msra.mxu0 0.0
    %612 = vmatprep.subr.mxu0 0.0
    %613 = vmatpush2.msra.mxu0 0.0
    %614 = vmatprep.subr.mxu0 0.0
    %615 = vmatpush2.msra.mxu0 0.0
    %616 = vmatprep.subr.mxu0 0.0
    %617 = vmatpush2.msra.mxu0 0.0
    %618 = vmatprep.subr.mxu0 0.0
    %619 = vmatpush2.msra.mxu0 0.0
    %620 = vmatprep.subr.mxu0 0.0
    %621 = vmatpush2.msra.mxu0 0.0
    %622 = vmatprep.subr.mxu0 0.0
    %623 = vmatpush2.msra.mxu0 0.0
    %624 = vmatprep.subr.mxu0 0.0
    %625 = vmatpush2.msra.mxu0 0.0
    %626 = vmatprep.mubr.f32.mxu0 0.0
    %627 = vmatmul.mubr.f32.gmra.mxu0 %v272
    %v628 = vpop.f32.mrf.mxu0
    %v629 = vadd.f32 %v345, %v628
    %v630 = vpop.f32.mrf.mxu0
    %v631 = vadd.f32 %v347, %v630
    %632 = vdwg.mxu0
    %633 = vmatprep.subr.mxu0 %v235
    %634 = vmatpush1.msra.mxu0 %v234
    %635 = vmatprep.subr.mxu0 %v227
    %636 = vmatpush1.msra.mxu0 %v226
    %637 = vmatprep.subr.mxu0 %v219
    %638 = vmatpush1.msra.mxu0 %v218
    %639 = vmatprep.subr.mxu0 %v211
    %640 = vmatpush1.msra.mxu0 %v210
    %641 = vmatprep.subr.mxu0 %v203
    %642 = vmatpush1.msra.mxu0 %v202
    %643 = vmatprep.subr.mxu0 %v195
    %644 = vmatpush1.msra.mxu0 %v194
    %645 = vmatprep.subr.mxu0 %v187
    %646 = vmatpush1.msra.mxu0 %v186
    %647 = vmatprep.subr.mxu0 %v179
    %648 = vmatpush1.msra.mxu0 %v178
    %649 = vmatprep.subr.mxu0 %v171
    %650 = vmatpush1.msra.mxu0 %v170
    %651 = vmatprep.subr.mxu0 %v163
    %652 = vmatpush1.msra.mxu0 %v162
    %653 = vmatprep.subr.mxu0 %v155
    %654 = vmatpush1.msra.mxu0 %v154
    %655 = vmatprep.subr.mxu0 %v147
    %656 = vmatpush1.msra.mxu0 %v146
    %657 = vmatprep.subr.mxu0 %v139
    %658 = vmatpush1.msra.mxu0 %v138
    %659 = vmatprep.subr.mxu0 %v131
    %660 = vmatpush1.msra.mxu0 %v130
    %661 = vmatprep.subr.mxu0 %v123
    %662 = vmatpush1.msra.mxu0 %v122
    %663 = vmatprep.subr.mxu0 %v115
    %664 = vmatpush1.msra.mxu0 %v114
    %665 = vmatprep.subr.mxu0 0.0
    %666 = vmatpush2.msra.mxu0 0.0
    %667 = vmatprep.subr.mxu0 0.0
    %668 = vmatpush2.msra.mxu0 0.0
    %669 = vmatprep.subr.mxu0 0.0
    %670 = vmatpush2.msra.mxu0 0.0
    %671 = vmatprep.subr.mxu0 0.0
    %672 = vmatpush2.msra.mxu0 0.0
    %673 = vmatprep.subr.mxu0 0.0
    %674 = vmatpush2.msra.mxu0 0.0
    %675 = vmatprep.subr.mxu0 0.0
    %676 = vmatpush2.msra.mxu0 0.0
    %677 = vmatprep.subr.mxu0 0.0
    %678 = vmatpush2.msra.mxu0 0.0
    %679 = vmatprep.subr.mxu0 0.0
    %680 = vmatpush2.msra.mxu0 0.0
    %681 = vmatprep.subr.mxu0 0.0
    %682 = vmatpush2.msra.mxu0 0.0
    %683 = vmatprep.subr.mxu0 0.0
    %684 = vmatpush2.msra.mxu0 0.0
    %685 = vmatprep.subr.mxu0 0.0
    %686 = vmatpush2.msra.mxu0 0.0
    %687 = vmatprep.subr.mxu0 0.0
    %688 = vmatpush2.msra.mxu0 0.0
    %689 = vmatprep.subr.mxu0 0.0
    %690 = vmatpush2.msra.mxu0 0.0
    %691 = vmatprep.subr.mxu0 0.0
    %692 = vmatpush2.msra.mxu0 0.0
    %693 = vmatprep.subr.mxu0 0.0
    %694 = vmatpush2.msra.mxu0 0.0
    %695 = vmatprep.subr.mxu0 0.0
    %696 = vmatpush2.msra.mxu0 0.0
    %697 = vmatprep.mubr.f32.mxu0 0.0
    %698 = vmatmul.mubr.f32.gmra.mxu0 %v272
    %v699 = vpop.f32.mrf.mxu0
    %v700 = vadd.f32 %v416, %v699
    %v701 = vpop.f32.mrf.mxu0
    %v702 = vadd.f32 %v418, %v701
    %703 = vdwg.mxu0
    %704 = vmatprep.subr.mxu0 %v237
    %705 = vmatpush1.msra.mxu0 %v236
    %706 = vmatprep.subr.mxu0 %v229
    %707 = vmatpush1.msra.mxu0 %v228
    %708 = vmatprep.subr.mxu0 %v221
    %709 = vmatpush1.msra.mxu0 %v220
    %710 = vmatprep.subr.mxu0 %v213
    %711 = vmatpush1.msra.mxu0 %v212
    %712 = vmatprep.subr.mxu0 %v205
    %713 = vmatpush1.msra.mxu0 %v204
    %714 = vmatprep.subr.mxu0 %v197
    %715 = vmatpush1.msra.mxu0 %v196
    %716 = vmatprep.subr.mxu0 %v189
    %717 = vmatpush1.msra.mxu0 %v188
    %718 = vmatprep.subr.mxu0 %v181
    %719 = vmatpush1.msra.mxu0 %v180
    %720 = vmatprep.subr.mxu0 %v173
    %721 = vmatpush1.msra.mxu0 %v172
    %722 = vmatprep.subr.mxu0 %v165
    %723 = vmatpush1.msra.mxu0 %v164
    %724 = vmatprep.subr.mxu0 %v157
    %725 = vmatpush1.msra.mxu0 %v156
    %726 = vmatprep.subr.mxu0 %v149
    %727 = vmatpush1.msra.mxu0 %v148
    %728 = vmatprep.subr.mxu0 %v141
    %729 = vmatpush1.msra.mxu0 %v140
    %730 = vmatprep.subr.mxu0 %v133
    %731 = vmatpush1.msra.mxu0 %v132
    %732 = vmatprep.subr.mxu0 %v125
    %733 = vmatpush1.msra.mxu0 %v124
    %734 = vmatprep.subr.mxu0 %v117
    %735 = vmatpush1.msra.mxu0 %v116
    %736 = vmatprep.subr.mxu0 0.0
    %737 = vmatpush2.msra.mxu0 0.0
    %738 = vmatprep.subr.mxu0 0.0
    %739 = vmatpush2.msra.mxu0 0.0
    %740 = vmatprep.subr.mxu0 0.0
    %741 = vmatpush2.msra.mxu0 0.0
    %742 = vmatprep.subr.mxu0 0.0
    %743 = vmatpush2.msra.mxu0 0.0
    %744 = vmatprep.subr.mxu0 0.0
    %745 = vmatpush2.msra.mxu0 0.0
    %746 = vmatprep.subr.mxu0 0.0
    %747 = vmatpush2.msra.mxu0 0.0
    %748 = vmatprep.subr.mxu0 0.0
    %749 = vmatpush2.msra.mxu0 0.0
    %750 = vmatprep.subr.mxu0 0.0
    %751 = vmatpush2.msra.mxu0 0.0
    %752 = vmatprep.subr.mxu0 0.0
    %753 = vmatpush2.msra.mxu0 0.0
    %754 = vmatprep.subr.mxu0 0.0
    %755 = vmatpush2.msra.mxu0 0.0
    %756 = vmatprep.subr.mxu0 0.0
    %757 = vmatpush2.msra.mxu0 0.0
    %758 = vmatprep.subr.mxu0 0.0
    %759 = vmatpush2.msra.mxu0 0.0
    %760 = vmatprep.subr.mxu0 0.0
    %761 = vmatpush2.msra.mxu0 0.0
    %762 = vmatprep.subr.mxu0 0.0
    %763 = vmatpush2.msra.mxu0 0.0
    %764 = vmatprep.subr.mxu0 0.0
    %765 = vmatpush2.msra.mxu0 0.0
    %766 = vmatprep.subr.mxu0 0.0
    %767 = vmatpush2.msra.mxu0 0.0
    %768 = vmatprep.mubr.f32.mxu0 0.0
    %769 = vmatmul.mubr.f32.gmra.mxu0 %v272
    %v770 = vpop.f32.mrf.mxu0
    %v771 = vadd.f32 %v487, %v770
    %v772 = vpop.f32.mrf.mxu0
    %v773 = vadd.f32 %v489, %v772
    %774 = vdwg.mxu0
    %775 = vmatprep.subr.mxu0 %v239
    %776 = vmatpush1.msra.mxu0 %v238
    %777 = vmatprep.subr.mxu0 %v231
    %778 = vmatpush1.msra.mxu0 %v230
    %779 = vmatprep.subr.mxu0 %v223
    %780 = vmatpush1.msra.mxu0 %v222
    %781 = vmatprep.subr.mxu0 %v215
    %782 = vmatpush1.msra.mxu0 %v214
    %783 = vmatprep.subr.mxu0 %v207
    %784 = vmatpush1.msra.mxu0 %v206
    %785 = vmatprep.subr.mxu0 %v199
    %786 = vmatpush1.msra.mxu0 %v198
    %787 = vmatprep.subr.mxu0 %v191
    %788 = vmatpush1.msra.mxu0 %v190
    %789 = vmatprep.subr.mxu0 %v183
    %790 = vmatpush1.msra.mxu0 %v182
    %791 = vmatprep.subr.mxu0 %v175
    %792 = vmatpush1.msra.mxu0 %v174
    %793 = vmatprep.subr.mxu0 %v167
    %794 = vmatpush1.msra.mxu0 %v166
    %795 = vmatprep.subr.mxu0 %v159
    %796 = vmatpush1.msra.mxu0 %v158
    %797 = vmatprep.subr.mxu0 %v151
    %798 = vmatpush1.msra.mxu0 %v150
    %799 = vmatprep.subr.mxu0 %v143
    %800 = vmatpush1.msra.mxu0 %v142
    %801 = vmatprep.subr.mxu0 %v135
    %802 = vmatpush1.msra.mxu0 %v134
    %803 = vmatprep.subr.mxu0 %v127
    %804 = vmatpush1.msra.mxu0 %v126
    %805 = vmatprep.subr.mxu0 %v119
    %806 = vmatpush1.msra.mxu0 %v118
    %807 = vmatprep.subr.mxu0 0.0
    %808 = vmatpush2.msra.mxu0 0.0
    %809 = vmatprep.subr.mxu0 0.0
    %810 = vmatpush2.msra.mxu0 0.0
    %811 = vmatprep.subr.mxu0 0.0
    %812 = vmatpush2.msra.mxu0 0.0
    %813 = vmatprep.subr.mxu0 0.0
    %814 = vmatpush2.msra.mxu0 0.0
    %815 = vmatprep.subr.mxu0 0.0
    %816 = vmatpush2.msra.mxu0 0.0
    %817 = vmatprep.subr.mxu0 0.0
    %818 = vmatpush2.msra.mxu0 0.0
    %819 = vmatprep.subr.mxu0 0.0
    %820 = vmatpush2.msra.mxu0 0.0
    %821 = vmatprep.subr.mxu0 0.0
    %822 = vmatpush2.msra.mxu0 0.0
    %823 = vmatprep.subr.mxu0 0.0
    %824 = vmatpush2.msra.mxu0 0.0
    %825 = vmatprep.subr.mxu0 0.0
    %826 = vmatpush2.msra.mxu0 0.0
    %827 = vmatprep.subr.mxu0 0.0
    %828 = vmatpush2.msra.mxu0 0.0
    %829 = vmatprep.subr.mxu0 0.0
    %830 = vmatpush2.msra.mxu0 0.0
    %831 = vmatprep.subr.mxu0 0.0
    %832 = vmatpush2.msra.mxu0 0.0
    %833 = vmatprep.subr.mxu0 0.0
    %834 = vmatpush2.msra.mxu0 0.0
    %835 = vmatprep.subr.mxu0 0.0
    %836 = vmatpush2.msra.mxu0 0.0
    %837 = vmatprep.subr.mxu0 0.0
    %838 = vmatpush2.msra.mxu0 0.0
    %839 = vmatprep.mubr.f32.mxu0 0.0
    %840 = vmatmul.mubr.f32.gmra.mxu0 %v272
    %v841 = vpop.f32.mrf.mxu0
    %v842 = vadd.f32 %v558, %v841
    %v843 = vpop.f32.mrf.mxu0
    %v844 = vadd.f32 %v560, %v843
    %845 = vdwg.mxu0
    %846 = vst [vmem:[#allocation12] sm:$0xff] %v629
    %s847 = scalar_lea.vmem [#allocation12], 8
    %848 = vst [vmem:[%s847] sm:$0xff] %v631
    %s849 = scalar_lea.vmem [#allocation12], 16
    %850 = vst [vmem:[%s849] sm:$0xff] %v700
    %s851 = scalar_lea.vmem [#allocation12], 24
    %852 = vst [vmem:[%s851] sm:$0xff] %v702
    %s853 = scalar_lea.vmem [#allocation12], 32
    %854 = vst [vmem:[%s853] sm:$0xff] %v771
    %s855 = scalar_lea.vmem [#allocation12], 40
    %856 = vst [vmem:[%s855] sm:$0xff] %v773
    %s857 = scalar_lea.vmem [#allocation12], 48
    %858 = vst [vmem:[%s857] sm:$0xff] %v842
    %s859 = scalar_lea.vmem [#allocation12], 56
    %860 = vst [vmem:[%s859] sm:$0xff] %v844
    %861 = vmatprep.subr.mxu0 0.0
    %862 = vmatpush1.msra.mxu0 0.0
    %863 = vmatprep.subr.mxu0 0.0
    %864 = vmatpush1.msra.mxu0 0.0
    %865 = vmatprep.subr.mxu0 0.0
    %866 = vmatpush1.msra.mxu0 0.0
    %867 = vmatprep.subr.mxu0 0.0
    %868 = vmatpush1.msra.mxu0 0.0
    %869 = vmatprep.subr.mxu0 0.0
    %870 = vmatpush1.msra.mxu0 0.0
    %871 = vmatprep.subr.mxu0 0.0
    %872 = vmatpush1.msra.mxu0 0.0
    %873 = vmatprep.subr.mxu0 0.0
    %874 = vmatpush1.msra.mxu0 0.0
    %875 = vmatprep.subr.mxu0 0.0
    %876 = vmatpush1.msra.mxu0 0.0
    %877 = vmatprep.subr.mxu0 0.0
    %878 = vmatpush1.msra.mxu0 0.0
    %879 = vmatprep.subr.mxu0 0.0
    %880 = vmatpush1.msra.mxu0 0.0
    %881 = vmatprep.subr.mxu0 0.0
    %882 = vmatpush1.msra.mxu0 0.0
    %883 = vmatprep.subr.mxu0 0.0
    %884 = vmatpush1.msra.mxu0 0.0
    %885 = vmatprep.subr.mxu0 0.0
    %886 = vmatpush1.msra.mxu0 %v111
    %887 = vmatprep.subr.mxu0 0.0
    %888 = vmatpush1.msra.mxu0 %v110
    %889 = vmatprep.subr.mxu0 0.0
    %890 = vmatpush1.msra.mxu0 %v109
    %891 = vmatprep.subr.mxu0 0.0
    %892 = vmatpush1.msra.mxu0 %v108
    %893 = vmatprep.subr.mxu0 0.0
    %894 = vmatpush2.msra.mxu0 0.0
    %895 = vmatprep.subr.mxu0 0.0
    %896 = vmatpush2.msra.mxu0 0.0
    %897 = vmatprep.subr.mxu0 0.0
    %898 = vmatpush2.msra.mxu0 0.0
    %899 = vmatprep.subr.mxu0 0.0
    %900 = vmatpush2.msra.mxu0 0.0
    %901 = vmatprep.subr.mxu0 0.0
    %902 = vmatpush2.msra.mxu0 0.0
    %903 = vmatprep.subr.mxu0 0.0
    %904 = vmatpush2.msra.mxu0 0.0
    %905 = vmatprep.subr.mxu0 0.0
    %906 = vmatpush2.msra.mxu0 0.0
    %907 = vmatprep.subr.mxu0 0.0
    %908 = vmatpush2.msra.mxu0 0.0
    %909 = vmatprep.subr.mxu0 0.0
    %910 = vmatpush2.msra.mxu0 0.0
    %911 = vmatprep.subr.mxu0 0.0
    %912 = vmatpush2.msra.mxu0 0.0
    %913 = vmatprep.subr.mxu0 0.0
    %914 = vmatpush2.msra.mxu0 0.0
    %915 = vmatprep.subr.mxu0 0.0
    %916 = vmatpush2.msra.mxu0 0.0
    %917 = vmatprep.subr.mxu0 0.0
    %918 = vmatpush2.msra.mxu0 0.0
    %919 = vmatprep.subr.mxu0 0.0
    %920 = vmatpush2.msra.mxu0 0.0
    %921 = vmatprep.subr.mxu0 0.0
    %922 = vmatpush2.msra.mxu0 0.0
    %923 = vmatprep.subr.mxu0 0.0
    %924 = vmatpush2.msra.mxu0 0.0
    %925 = vmatprep.mubr.f32.mxu0 0.0
    %926 = vmatmul.mubr.f32.gmra.mxu0 %v276
    %v927 = vpop.f32.mrf.mxu0
    %v928 = vadd.f32 0.0, %v927
    %v929 = vpop.f32.mrf.mxu0
    %930 = vdwg.mxu0
    %931 = vmatprep.subr.mxu0 0.0
    %932 = vmatpush1.msra.mxu0 %v107
    %933 = vmatprep.subr.mxu0 0.0
    %934 = vmatpush1.msra.mxu0 %v106
    %935 = vmatprep.subr.mxu0 0.0
    %936 = vmatpush1.msra.mxu0 %v105
    %937 = vmatprep.subr.mxu0 0.0
    %938 = vmatpush1.msra.mxu0 %v104
    %939 = vmatprep.subr.mxu0 0.0
    %940 = vmatpush1.msra.mxu0 %v103
    %941 = vmatprep.subr.mxu0 0.0
    %942 = vmatpush1.msra.mxu0 %v102
    %943 = vmatprep.subr.mxu0 0.0
    %944 = vmatpush1.msra.mxu0 %v101
    %945 = vmatprep.subr.mxu0 0.0
    %946 = vmatpush1.msra.mxu0 %v100
    %947 = vmatprep.subr.mxu0 0.0
    %948 = vmatpush1.msra.mxu0 %v99
    %949 = vmatprep.subr.mxu0 0.0
    %950 = vmatpush1.msra.mxu0 %v98
    %951 = vmatprep.subr.mxu0 0.0
    %952 = vmatpush1.msra.mxu0 %v97
    %953 = vmatprep.subr.mxu0 0.0
    %954 = vmatpush1.msra.mxu0 %v96
    %955 = vmatprep.subr.mxu0 0.0
    %956 = vmatpush1.msra.mxu0 %v95
    %957 = vmatprep.subr.mxu0 0.0
    %958 = vmatpush1.msra.mxu0 %v94
    %959 = vmatprep.subr.mxu0 0.0
    %960 = vmatpush1.msra.mxu0 %v93
    %961 = vmatprep.subr.mxu0 0.0
    %962 = vmatpush1.msra.mxu0 %v92
    %963 = vmatprep.subr.mxu0 0.0
    %964 = vmatpush2.msra.mxu0 0.0
    %965 = vmatprep.subr.mxu0 0.0
    %966 = vmatpush2.msra.mxu0 0.0
    %967 = vmatprep.subr.mxu0 0.0
    %968 = vmatpush2.msra.mxu0 0.0
    %969 = vmatprep.subr.mxu0 0.0
    %970 = vmatpush2.msra.mxu0 0.0
    %971 = vmatprep.subr.mxu0 0.0
    %972 = vmatpush2.msra.mxu0 0.0
    %973 = vmatprep.subr.mxu0 0.0
    %974 = vmatpush2.msra.mxu0 0.0
    %975 = vmatprep.subr.mxu0 0.0
    %976 = vmatpush2.msra.mxu0 0.0
    %977 = vmatprep.subr.mxu0 0.0
    %978 = vmatpush2.msra.mxu0 0.0
    %979 = vmatprep.subr.mxu0 0.0
    %980 = vmatpush2.msra.mxu0 0.0
    %981 = vmatprep.subr.mxu0 0.0
    %982 = vmatpush2.msra.mxu0 0.0
    %983 = vmatprep.subr.mxu0 0.0
    %984 = vmatpush2.msra.mxu0 0.0
    %985 = vmatprep.subr.mxu0 0.0
    %986 = vmatpush2.msra.mxu0 0.0
    %987 = vmatprep.subr.mxu0 0.0
    %988 = vmatpush2.msra.mxu0 0.0
    %989 = vmatprep.subr.mxu0 0.0
    %990 = vmatpush2.msra.mxu0 0.0
    %991 = vmatprep.subr.mxu0 0.0
    %992 = vmatpush2.msra.mxu0 0.0
    %993 = vmatprep.subr.mxu0 0.0
    %994 = vmatpush2.msra.mxu0 0.0
    %995 = vmatprep.mubr.f32.mxu0 0.0
    %996 = vmatmul.mubr.f32.gmra.mxu0 %v272
    %v997 = vpop.f32.mrf.mxu0
    %v998 = vadd.f32 %v928, %v997
    %v999 = vpop.f32.mrf.mxu0
    %1000 = vdwg.mxu0
    %1001 = vst [vmem:[#allocation2] sm:$0xff] %v998
    // Predicated region
    $region46: #{tpu_custom_call.1} parent=1 // pred_check
      _
    $region47: #{tpu_custom_call.1} parent=1 // pred_check_branch
      %1003 = sbr.rel (0) target = $region49
    $region48: #{tpu_custom_call.1} parent=1 // pred_region
      %s1005 = ssub.s32 1024, 1024
      %1006 = vsyncadd [#allocation5], %s1005
      %s1007 = sshll.u32 [#allocation12], 4
      %s1008 = int_to_ptr.vmem [resolvable:$true] %s1007
      %1013 = dma.vmem_to_hbm [thread:$0]  %s1008, 1024, %s5, [#allocation5], 128, 128, 8
    $region49: #{tpu_custom_call.1} parent=1 // pred_fallthru
      _
    // Predicated region
    $region50: #{tpu_custom_call.1} parent=1 // pred_check
      _
    $region51: #{tpu_custom_call.1} parent=1 // pred_check_branch
      %1015 = sbr.rel (0) target = $region53
    $region52: #{tpu_custom_call.1} parent=1 // pred_region
      %1016 = dma.done [#allocation5], 1024
    $region53: #{tpu_custom_call.1} parent=1 // pred_fallthru
      _
    %1017 = vsyncpa [#allocation4], 1
    %1018 = vsyncpa [#allocation7], 1
    %1019 = vsyncpa [#allocation10], 1
    %1020 = vsyncpa [#allocation5], 1

</llo_original>
